<compile_context>
chip_gen: v7x
topology: tpu7x:2x2x1
jax: 0.10.0
libtpu: 0.0.40
codegen_flags: <defaults>
</compile_context>

<pallas_src>
import functools

import numpy as np

import jax
import jax.numpy as jnp
from jax.experimental import pallas as pl
from jax.experimental.pallas import tpu as pltpu


def _build_window_weights(L: int, kernel_size: int, stride: int, pad: int, L_out: int):
    """Banded (L_out, L) integer count matrix folding replicate padding + stride."""
    w = np.zeros((L_out, L), dtype=np.float32)
    for t in range(L_out):
        base = t * stride - pad
        for j in range(kernel_size):
            src = min(max(base + j, 0), L - 1)  # replicate-pad clamp
            w[t, src] += 1.0
    return w


def _pick_channel_tile(C: int, L: int, itemsize: int) -> int:
    """Lane tile over channels: multiple of 128 dividing C, sized for ~2-4 MiB x-blocks."""
    if C <= 128 or C % 128 != 0:
        return C  # full extent (block dim == array dim is always legal)
    target = 4 << 20  # ~4 MiB input slab per grid step
    max_tc = (target // max(1, L * itemsize)) // 128 * 128
    max_tc = max(128, min(C, max_tc))
    for cand in range(max_tc, 127, -128):
        if C % cand == 0:
            return cand
    return 128


def _make_kernel(inv_k: float, w_dtype, precision):
    def kernel(w_ref, x_ref, o_ref):
        # w_ref: (L_out, L)   x_ref: (L, tc)   o_ref: (L_out, tc)   (batch dim squeezed)
        x = x_ref[...]
        if x.dtype != w_dtype:
            x = x.astype(w_dtype)
        acc = jnp.dot(
            w_ref[...],
            x,
            preferred_element_type=jnp.float32,
            precision=precision,
        )
        o_ref[...] = (acc * inv_k).astype(o_ref.dtype)

    return kernel


@functools.partial(jax.jit, static_argnames=("kernel_size", "stride"))
def moving_avg_pallas(x, *, kernel_size: int, stride: int):
    """x: (B, L, C) -> (B, L_out, C), matching the PyTorch moving_avg module."""
    B, L, C = x.shape
    pad = (kernel_size - 1) // 2
    L_pad = L + 2 * pad
    L_out = (L_pad - kernel_size) // stride + 1
    assert L_out >= 1, "kernel_size/stride incompatible with sequence length"
    itemsize = jnp.dtype(x.dtype).itemsize

    # Weights consumed natively by the MXU: bf16 for bf16 inputs, else f32 (HIGHEST).
    if x.dtype == jnp.bfloat16:
        w_dtype = jnp.bfloat16
        precision = jax.lax.Precision.DEFAULT
    else:
        w_dtype = jnp.float32
        precision = jax.lax.Precision.HIGHEST
    w = jnp.asarray(_build_window_weights(L, kernel_size, stride, pad, L_out), dtype=w_dtype)

    tc = _pick_channel_tile(C, L, itemsize)
    grid = (B, C // tc)

    # VMEM budget: resident W + double-buffered x/out blocks; cap at 48 MiB for v7x.
    lanes = max(tc, 128)
    w_bytes = L_out * max(L, 128) * jnp.dtype(w_dtype).itemsize
    blk_bytes = (L * lanes + L_out * lanes) * itemsize
    vmem_limit = int(min(48 * 2**20, max(32 * 2**20, 2 * (w_bytes + 2 * blk_bytes))))

    kernel = _make_kernel(1.0 / float(kernel_size), w_dtype, precision)

    out = pl.pallas_call(
        kernel,
        out_shape=jax.ShapeDtypeStruct((B, L_out, C), x.dtype),
        grid=grid,
        in_specs=[
            # W: full block, constant index -> fetched once, stays resident in VMEM.
            pl.BlockSpec((L_out, L), lambda b, c: (0, 0)),
            # x[b]: contiguous (L, tc) slab; batch dim squeezed out of the kernel view.
            pl.BlockSpec((None, L, tc), lambda b, c: (b, 0, c)),
        ],
        out_specs=pl.BlockSpec((None, L_out, tc), lambda b, c: (b, 0, c)),
        compiler_params=pltpu.CompilerParams(
            dimension_semantics=("parallel", "parallel"),
            vmem_limit_bytes=vmem_limit,
        ),
    )(w, x)
    return out


def moving_avg_reference(x, kernel_size: int, stride: int):
    """Pure-JAX reference reproducing the PyTorch forward exactly."""
    pad = (kernel_size - 1) // 2
    front = jnp.repeat(x[:, 0:1, :], pad, axis=1)
    end = jnp.repeat(x[:, -1:, :], pad, axis=1)
    xp = jnp.concatenate([front, x, end], axis=1)  # (B, L_pad, C)
    L_pad = xp.shape[1]
    L_out = (L_pad - kernel_size) // stride + 1
    return jnp.stack(
        [xp[:, t * stride: t * stride + kernel_size, :].mean(axis=1) for t in range(L_out)],
        axis=1,
    )


if __name__ == "__main__":
    key = jax.random.PRNGKey(0)
    configs = [
        dict(B=2, L=32, C=8, kernel_size=25, stride=1, dtype=jnp.float32, atol=1e-5),
        dict(B=3, L=16, C=4, kernel_size=5, stride=1, dtype=jnp.float32, atol=1e-5),
        dict(B=2, L=32, C=8, kernel_size=7, stride=2, dtype=jnp.float32, atol=1e-5),
        dict(B=2, L=24, C=256, kernel_size=25, stride=1, dtype=jnp.bfloat16, atol=2e-2),
    ]
    for i, cfg in enumerate(configs):
        key, sub = jax.random.split(key)
        x = jax.random.normal(sub, (cfg["B"], cfg["L"], cfg["C"]), dtype=cfg["dtype"])
        out = jax.block_until_ready(
            moving_avg_pallas(x, kernel_size=cfg["kernel_size"], stride=cfg["stride"])
        )
        ref = moving_avg_reference(
            x.astype(jnp.float32), cfg["kernel_size"], cfg["stride"]
        )
        assert out.shape == ref.shape, (i, out.shape, ref.shape)
        assert out.dtype == x.dtype, (i, out.dtype, x.dtype)
        err = jnp.max(jnp.abs(out.astype(jnp.float32) - ref))
        assert float(err) <= cfg["atol"], f"mismatch vs reference in config {i}: max err {err}"
    print("KERNEL_OK")
</pallas_src>

<mosaic_0001>
module attributes {stable_mosaic.version = 11 : i64} {
  func.func @kernel(%arg0: i32, %arg1: i32, %arg2: memref<32x32xf32, #tpu.memory_space<vmem>>, %arg3: memref<1x32x8xf32, #tpu.memory_space<vmem>>, %arg4: memref<1x32x8xf32, #tpu.memory_space<vmem>>) attributes {dimension_semantics = [#tpu.dimension_semantics<parallel>, #tpu.dimension_semantics<parallel>], iteration_bounds = array<i64: 2, 1>, scalar_prefetch = 0 : i64, scratch_operands = 0 : i64, tpu.core_type = #tpu.core_type<tc>, window_params = [{pipeline_mode = #tpu.pipeline_mode<synchronous>, transform_indices = @transform_0, window_bounds = array<i64: 32, 32>}, {transform_indices = @transform_1, window_bounds = array<i64: 1, 32, 8>}, {transform_indices = @transform_2, window_bounds = array<i64: 1, 32, 8>}]} {
    %c0 = arith.constant 0 : index
    %c0_0 = arith.constant 0 : index
    %c0_1 = arith.constant 0 : index
    %0 = vector.load %arg3[%c0, %c0_0, %c0_1] : memref<1x32x8xf32, #tpu.memory_space<vmem>>, vector<1x32x8xf32>
    %1 = vector.shape_cast %0 : vector<1x32x8xf32> to vector<32x8xf32>
    %c0_2 = arith.constant 0 : index
    %c0_3 = arith.constant 0 : index
    %2 = vector.load %arg2[%c0_2, %c0_3] : memref<32x32xf32, #tpu.memory_space<vmem>>, vector<32x32xf32>
    %cst = arith.constant dense<0.000000e+00> : vector<32x8xf32>
    %3 = tpu.matmul %2, %1, %cst {dimension_numbers = #tpu.dot_dimension_numbers<[1], [0], [0], [1], [0, 0, 1, 1], [], []>, precision = #tpu.contract_precision<fp32>} : vector<32x32xf32>, vector<32x8xf32>, vector<32x8xf32> -> vector<32x8xf32>
    %cst_4 = arith.constant 4.000000e-02 : f32
    %4 = vector.broadcast %cst_4 : f32 to vector<32x8xf32>
    %5 = arith.mulf %3, %4 : vector<32x8xf32>
    %c0_5 = arith.constant 0 : index
    %c0_6 = arith.constant 0 : index
    %c0_7 = arith.constant 0 : index
    %6 = vector.load %arg4[%c0_5, %c0_6, %c0_7] : memref<1x32x8xf32, #tpu.memory_space<vmem>>, vector<1x32x8xf32>
    %7 = vector.shape_cast %6 : vector<1x32x8xf32> to vector<32x8xf32>
    %8 = vector.shape_cast %5 : vector<32x8xf32> to vector<1x32x8xf32>
    tpu.vector_store %arg4[%c0_5, %c0_6, %c0_7], %8 {strides = array<i32>} : memref<1x32x8xf32, #tpu.memory_space<vmem>>, vector<1x32x8xf32>,
    return
  }
  func.func @transform_0(%arg0: i32, %arg1: i32) -> (i32, i32) {
    %c0_i32 = arith.constant 0 : i32
    %c0_i32_0 = arith.constant 0 : i32
    %c0_i32_1 = arith.constant 0 : i32
    return %c0_i32, %c0_i32_0 : i32, i32
  }
  func.func @transform_1(%arg0: i32, %arg1: i32) -> (i32, i32, i32) {
    %c0_i32 = arith.constant 0 : i32
    %c0_i32_0 = arith.constant 0 : i32
    return %arg0, %c0_i32, %arg1 : i32, i32, i32
  }
  func.func @transform_2(%arg0: i32, %arg1: i32) -> (i32, i32, i32) {
    %c0_i32 = arith.constant 0 : i32
    %c0_i32_0 = arith.constant 0 : i32
    return %arg0, %c0_i32, %arg1 : i32, i32, i32
  }
}

</mosaic_0001>

<llo_original>
// kernel: moving_avg_pallas.1
$region0: #{moving_avg_pallas.1}
  #allocation0 [shape = 'u32[]', space=smem, size = 0x4, offset = 0x4, fixed_abs, tag = 'smem constant byte address 0x4 - core index']
  #allocation1 [shape = 'u32[144,128]{1,0:T(1,128)}', space=vmem, size = 0x12000, scoped, tag = 'internal scratch']
  %s0 = inlined_call_operand.vmem [shape: f32[32,32], index: 0, kind: input, shape index: {}]
  %s1 = inlined_call_operand.vmem [shape: f32[2,32,8], index: 1, kind: input, shape index: {}]
  %s2 = inlined_call_operand.vmem [shape: f32[2,32,8], index: 2, kind: output, shape index: {}]
  %s3 = sld [smem:[#allocation0]]
  $region41: #{moving_avg_pallas.1} parent=0
    _
  %s5 = ssub.s32 1, %s3
  %s6 = scalar_select 0, %s5, %s3
  loop: start=0, step=1, limit=4
  $region2: #{moving_avg_pallas.1} parent=0 // loop_pre_header
    _
  $region3: #{moving_avg_pallas.1} parent=0 // loop_header
    %s8 = sphi 0, %s12
    %p9 = scmp.ge.s32.totalorder %s8, 4
    %s15 = sphi 0, %s27
    %s16 = sphi 0, %s23
    %s17 = sphi 0, %s15
    %s18 = sphi 0, %s16
    %s19 = sphi 0, %s17
    %s20 = sphi 0, %s18
    %s28 = sphi 0, %s28
    %s30 = sphi 0, %s28
    %s31 = sphi 0, %s30
    %s45 = sphi 0, %s31
    %s53 = sphi 0, %s55
    %s56 = sphi 0, %s53
    %s57 = sphi 0, %s56
    %s73 = sphi 0, %s57
    %s81 = sphi 0, %s83
    %s84 = sphi 0, %s81
    %s85 = sphi 0, %s84
    %s101 = sphi 0, %s85
  $region4: #{moving_avg_pallas.1} parent=0 // loop_header_branch
    %11 = sbr.rel (%p9) target = $region8
  $region5: #{moving_avg_pallas.1} parent=0 // loop_body
    %s13 = ssub.s32 %s8, 1
    %s14 = ssub.s32 %s8, 2
    %s21 = sadd.s32 1, %s16
    %p22 = scmp.ge.s32.totalorder %s21, 1
    %s23 = scalar_select %p22, 0, %s21
    %s24 = sadd.s32 1, %s15
    %s25 = scalar_select %p22, %s24, %s15
    %p26 = scmp.ge.s32.totalorder %s25, 2
    %s27 = scalar_select %p26, 0, %s25
    %s29 = sadd.s32 %s28, 1
    %p32 = scmp.eq.s32.totalorder %s8, 1
    %p33 = scmp.ne.s32.totalorder %s28, %s30
    %p34 = scmp.eq.s32.totalorder %s8, 0
    %p35 = por %p33, %p34
    %p36 = scmp.ne.s32.totalorder %s28, %s30
    %p37 = scmp.eq.s32.totalorder %s13, 1
    %p38 = por %p36, %p37
    %p39 = scmp.ne.s32.totalorder %s30, %s31
    %p40 = scmp.eq.s32.totalorder %s13, 0
    %p41 = por %p39, %p40
    %p42 = scmp.ne.s32.totalorder %s30, %s31
    %p43 = scmp.eq.s32.totalorder %s14, 1
    %p44 = por %p42, %p43
    %p46 = scmp.ne.s32.totalorder %s31, %s45
    %p47 = scmp.eq.s32.totalorder %s14, 0
    %p48 = por %p46, %p47
    %s49 = ssub.s32 %s15, %s27
    %s50 = ssub.s32 %s16, %s23
    %s51 = sor.u32 %s49, %s50
    %p52 = scmp.eq.s32.totalorder %s51, 0
    %s54 = sadd.s32 %s53, 1
    %s55 = scalar_select %p52, %s53, %s54
    %p58 = pneg %p52
    %p59 = scmp.eq.s32.totalorder %s8, 1
    %p60 = por %p58, %p59
    %p61 = scmp.ne.s32.totalorder %s53, %s56
    %p62 = scmp.eq.s32.totalorder %s8, 0
    %p63 = por %p61, %p62
    %p64 = scmp.ne.s32.totalorder %s53, %s56
    %p65 = scmp.eq.s32.totalorder %s13, 1
    %p66 = por %p64, %p65
    %p67 = scmp.ne.s32.totalorder %s56, %s57
    %p68 = scmp.eq.s32.totalorder %s13, 0
    %p69 = por %p67, %p68
    %p70 = scmp.ne.s32.totalorder %s56, %s57
    %p71 = scmp.eq.s32.totalorder %s14, 1
    %p72 = por %p70, %p71
    %p74 = scmp.ne.s32.totalorder %s57, %s73
    %p75 = scmp.eq.s32.totalorder %s14, 0
    %p76 = por %p74, %p75
    %s77 = ssub.s32 %s15, %s27
    %s78 = ssub.s32 %s16, %s23
    %s79 = sor.u32 %s77, %s78
    %p80 = scmp.eq.s32.totalorder %s79, 0
    %s82 = sadd.s32 %s81, 1
    %s83 = scalar_select %p80, %s81, %s82
    %p86 = pneg %p80
    %p87 = scmp.eq.s32.totalorder %s8, 1
    %p88 = por %p86, %p87
    %p89 = scmp.ne.s32.totalorder %s81, %s84
    %p90 = scmp.eq.s32.totalorder %s8, 0
    %p91 = por %p89, %p90
    %p92 = scmp.ne.s32.totalorder %s81, %s84
    %p93 = scmp.eq.s32.totalorder %s13, 1
    %p94 = por %p92, %p93
    %p95 = scmp.ne.s32.totalorder %s84, %s85
    %p96 = scmp.eq.s32.totalorder %s13, 0
    %p97 = por %p95, %p96
    %p98 = scmp.ne.s32.totalorder %s84, %s85
    %p99 = scmp.eq.s32.totalorder %s14, 1
    %p100 = por %p98, %p99
    %p102 = scmp.ne.s32.totalorder %s85, %s101
    %p103 = scmp.eq.s32.totalorder %s14, 0
    %p104 = por %p102, %p103
    %p105 = scmp.le.s32.totalorder 1, %s8
    %p106 = scmp.lt.s32.totalorder %s8, 3
    %p107 = pnand %p105, %p106
    %p108 = pneg %p107
    // Predicated region
    $region9: #{moving_avg_pallas.1} parent=5 // pred_check
      _
    $region10: #{moving_avg_pallas.1} parent=5 // pred_check_branch
      %110 = sbr.rel (%p107) target = $region12
    $region11: #{moving_avg_pallas.1} parent=5 // pred_region
      %s111 = ssub.s32 %s8, 1
      // Predicated region
      $region13: #{moving_avg_pallas.1} parent=11 // pred_check
        %p112 = pneg %p41
      $region14: #{moving_avg_pallas.1} parent=11 // pred_check_branch
        %114 = sbr.rel (%p112) target = $region16
      $region15: #{moving_avg_pallas.1} parent=11 // pred_region
        _
      $region16: #{moving_avg_pallas.1} parent=11 // pred_fallthru
        _
    $region12: #{moving_avg_pallas.1} parent=5 // pred_fallthru
      _
    %p115 = scmp.lt.s32.totalorder %s8, 2
    // Predicated region
    $region17: #{moving_avg_pallas.1} parent=5 // pred_check
      %p116 = pneg %p115
    $region18: #{moving_avg_pallas.1} parent=5 // pred_check_branch
      %118 = sbr.rel (%p116) target = $region20
    $region19: #{moving_avg_pallas.1} parent=5 // pred_region
      // Predicated region
      $region21: #{moving_avg_pallas.1} parent=19 // pred_check
        %p119 = pneg %p63
      $region22: #{moving_avg_pallas.1} parent=19 // pred_check_branch
        %121 = sbr.rel (%p119) target = $region24
      $region23: #{moving_avg_pallas.1} parent=19 // pred_region
        %p122 = scmp.lt.s32.totalorder %s15, 1
        %s123 = scalar_select %p122, %s15, 1
        %p124 = scmp.lt.s32.totalorder %s16, 0
        %s125 = scalar_select %p124, %s16, 0
        %s126 = smul.addr %s123, 4
        %s127 = sadd.s32 %s125, %s126
        %s128 = smul.addr %s127, 8
        %s129 = scalar_lea.vmem %s1, %s128
      $region24: #{moving_avg_pallas.1} parent=19 // pred_fallthru
        _
    $region20: #{moving_avg_pallas.1} parent=5 // pred_fallthru
      _
    %p130 = scmp.le.s32.totalorder 1, %s8
    %p131 = scmp.lt.s32.totalorder %s8, 3
    %p132 = pnand %p130, %p131
    %p133 = pneg %p132
    // Predicated region
    $region25: #{moving_avg_pallas.1} parent=5 // pred_check
      _
    $region26: #{moving_avg_pallas.1} parent=5 // pred_check_branch
      %135 = sbr.rel (%p132) target = $region28
    $region27: #{moving_avg_pallas.1} parent=5 // pred_region
      %s136 = ssub.s32 %s8, 1
      %p137 = pneg %p41
      %p138 = pneg %p38
      %p139 = scmp.lt.s32.totalorder %s17, 1
      %s140 = scalar_select %p139, %s17, 1
      %p141 = scmp.lt.s32.totalorder %s18, 0
      %s142 = scalar_select %p141, %s18, 0
      %s143 = smul.addr %s140, 4
      %s144 = sadd.s32 %s142, %s143
      %s145 = smul.addr %s144, 8
      %s146 = scalar_lea.vmem %s1, %s145
      %p147 = pneg %p69
      %p148 = pneg %p66
      %p149 = pneg %p97
      %p150 = pneg %p94
      %p151 = scmp.lt.s32.totalorder %s17, 1
      %s152 = scalar_select %p151, %s17, 1
      %p153 = scmp.lt.s32.totalorder %s18, 0
      %s154 = scalar_select %p153, %s18, 0
      %s155 = smul.addr %s152, 4
      %s156 = sadd.s32 %s154, %s155
      %s157 = smul.addr %s156, 8
      %s158 = scalar_lea.vmem %s2, %s157
      %p159 = scmp.lt.s32.totalorder %s17, 1
      %s160 = scalar_select %p159, %s17, 1
      %p161 = scmp.lt.s32.totalorder %s18, 0
      %s162 = scalar_select %p161, %s18, 0
      %s163 = smul.addr %s160, 4
      %s164 = sadd.s32 %s162, %s163
      %s165 = smul.addr %s164, 8
      %s166 = scalar_lea.vmem %s1, %s165
      %p167 = scmp.lt.s32.totalorder %s17, 1
      %s168 = scalar_select %p167, %s17, 1
      %p169 = scmp.lt.s32.totalorder %s18, 0
      %s170 = scalar_select %p169, %s18, 0
      %s171 = smul.addr %s168, 4
      %s172 = sadd.s32 %s170, %s171
      %s173 = smul.addr %s172, 8
      %s174 = scalar_lea.vmem %s2, %s173
      %v175 = vld [vmem:[%s166] sm:$0xff]
      %v176 = vld [vmem:[%s166 + $0x8] sm:$0xff]
      %v177 = vld [vmem:[%s166 + $0x10] sm:$0xff]
      %v178 = vld [vmem:[%s166 + $0x18] sm:$0xff]
      %v179 = vld [vmem:[%s0] sm:$0xff]
      %v180 = vld [vmem:[%s0 + $0x8] sm:$0xff]
      %v181 = vld [vmem:[%s0 + $0x10] sm:$0xff]
      %v182 = vld [vmem:[%s0 + $0x18] sm:$0xff]
      %vm183 = vcmask 261120
      %v185 = vsel %vm183, %v179, 0
      %v188 = vsel %vm183, %v180, 0
      %v191 = vsel %vm183, %v181, 0
      %v194 = vsel %vm183, %v182, 0
      %196 = vmatprep.subr.mxu0 0.0
      %v197 = vand.u32 %v175, 4294901760
      %198 = vmatpush1.msra.mxu0 %v197
      %199 = vmatprep.subr.mxu0 0.0
      %v200 = vand.u32 %v176, 4294901760
      %201 = vmatpush1.msra.mxu0 %v200
      %202 = vmatprep.subr.mxu0 0.0
      %v203 = vand.u32 %v177, 4294901760
      %204 = vmatpush1.msra.mxu0 %v203
      %205 = vmatprep.subr.mxu0 0.0
      %v206 = vand.u32 %v178, 4294901760
      %207 = vmatpush1.msra.mxu0 %v206
      %208 = vmatprep.subr.mxu0 0.0
      %209 = vmatpush1.msra.mxu0 0.0
      %210 = vmatprep.subr.mxu0 0.0
      %211 = vmatpush1.msra.mxu0 0.0
      %212 = vmatprep.subr.mxu0 0.0
      %213 = vmatpush1.msra.mxu0 0.0
      %214 = vmatprep.subr.mxu0 0.0
      %215 = vmatpush1.msra.mxu0 0.0
      %216 = vmatprep.subr.mxu0 0.0
      %217 = vmatpush1.msra.mxu0 0.0
      %218 = vmatprep.subr.mxu0 0.0
      %219 = vmatpush1.msra.mxu0 0.0
      %220 = vmatprep.subr.mxu0 0.0
      %221 = vmatpush1.msra.mxu0 0.0
      %222 = vmatprep.subr.mxu0 0.0
      %223 = vmatpush1.msra.mxu0 0.0
      %224 = vmatprep.subr.mxu0 0.0
      %225 = vmatpush1.msra.mxu0 0.0
      %226 = vmatprep.subr.mxu0 0.0
      %227 = vmatpush1.msra.mxu0 0.0
      %228 = vmatprep.subr.mxu0 0.0
      %229 = vmatpush1.msra.mxu0 0.0
      %230 = vmatprep.subr.mxu0 0.0
      %231 = vmatpush1.msra.mxu0 0.0
      %232 = vmatprep.subr.mxu0 0.0
      %233 = vmatpush1.msra.mxu0 0.0
      %234 = vmatprep.subr.mxu0 0.0
      %235 = vmatpush1.msra.mxu0 0.0
      %236 = vmatprep.subr.mxu0 0.0
      %237 = vmatpush1.msra.mxu0 0.0
      %238 = vmatprep.subr.mxu0 0.0
      %239 = vmatpush1.msra.mxu0 0.0
      %240 = vmatprep.subr.mxu0 0.0
      %241 = vmatpush1.msra.mxu0 0.0
      %242 = vmatprep.subr.mxu0 0.0
      %243 = vmatpush1.msra.mxu0 0.0
      %244 = vmatprep.subr.mxu0 0.0
      %245 = vmatpush1.msra.mxu0 0.0
      %246 = vmatprep.subr.mxu0 0.0
      %247 = vmatpush1.msra.mxu0 0.0
      %248 = vmatprep.subr.mxu0 0.0
      %249 = vmatpush1.msra.mxu0 0.0
      %250 = vmatprep.subr.mxu0 0.0
      %251 = vmatpush1.msra.mxu0 0.0
      %252 = vmatprep.subr.mxu0 0.0
      %253 = vmatpush1.msra.mxu0 0.0
      %254 = vmatprep.subr.mxu0 0.0
      %255 = vmatpush1.msra.mxu0 0.0
      %256 = vmatprep.subr.mxu0 0.0
      %257 = vmatpush1.msra.mxu0 0.0
      %258 = vmatprep.subr.mxu0 0.0
      %259 = vmatpush1.msra.mxu0 0.0
      %260 = vmatprep.subr.mxu0 0.0
      %261 = vmatpush1.msra.mxu0 0.0
      %262 = vmatprep.subr.mxu0 0.0
      %263 = vmatpush1.msra.mxu0 0.0
      %264 = vmatprep.mubr.f32.mxu0 0.0
      %v265 = vand.u32 %v185, 4294901760
      %v266 = vsub.f32 %v185, %v265
      %v267 = vand.u32 %v266, 4294901760
      %v268 = vsub.f32 %v266, %v267
      %v269 = vand.u32 %v268, 4294901760
      %270 = vmatmul.mubr.f32.gmra.mrb[0].mxu0 %v269
      %v271 = vpop.f32.mrb[0].mxu0
      %v272 = vadd.f32 0.0, %v271
      %v273 = vpop.f32.mrb[0].mxu0
      %274 = vmatprep.mubr.f32.mxu0 0.0
      %v275 = vand.u32 %v188, 4294901760
      %v276 = vsub.f32 %v188, %v275
      %v277 = vand.u32 %v276, 4294901760
      %v278 = vsub.f32 %v276, %v277
      %v279 = vand.u32 %v278, 4294901760
      %280 = vmatmul.mubr.f32.gmra.mrb[0].mxu0 %v279
      %v281 = vpop.f32.mrb[0].mxu0
      %v282 = vadd.f32 0.0, %v281
      %v283 = vpop.f32.mrb[0].mxu0
      %284 = vmatprep.mubr.f32.mxu0 0.0
      %v285 = vand.u32 %v191, 4294901760
      %v286 = vsub.f32 %v191, %v285
      %v287 = vand.u32 %v286, 4294901760
      %v288 = vsub.f32 %v286, %v287
      %v289 = vand.u32 %v288, 4294901760
      %290 = vmatmul.mubr.f32.gmra.mrb[0].mxu0 %v289
      %v291 = vpop.f32.mrb[0].mxu0
      %v292 = vadd.f32 0.0, %v291
      %v293 = vpop.f32.mrb[0].mxu0
      %294 = vmatprep.mubr.f32.mxu0 0.0
      %v295 = vand.u32 %v194, 4294901760
      %v296 = vsub.f32 %v194, %v295
      %v297 = vand.u32 %v296, 4294901760
      %v298 = vsub.f32 %v296, %v297
      %v299 = vand.u32 %v298, 4294901760
      %300 = vmatmul.mubr.f32.gmra.mrb[0].mxu0 %v299
      %v301 = vpop.f32.mrb[0].mxu0
      %v302 = vadd.f32 0.0, %v301
      %v303 = vpop.f32.mrb[0].mxu0
      %304 = vdwg.mxu0
      %305 = vmatprep.subr.mxu0 0.0
      %v306 = vand.u32 %v175, 4294901760
      %v307 = vsub.f32 %v175, %v306
      %v308 = vand.u32 %v307, 4294901760
      %v309 = vsub.f32 %v307, %v308
      %v310 = vand.u32 %v309, 4294901760
      %311 = vmatpush1.msra.mxu0 %v310
      %312 = vmatprep.subr.mxu0 0.0
      %v313 = vand.u32 %v176, 4294901760
      %v314 = vsub.f32 %v176, %v313
      %v315 = vand.u32 %v314, 4294901760
      %v316 = vsub.f32 %v314, %v315
      %v317 = vand.u32 %v316, 4294901760
      %318 = vmatpush1.msra.mxu0 %v317
      %319 = vmatprep.subr.mxu0 0.0
      %v320 = vand.u32 %v177, 4294901760
      %v321 = vsub.f32 %v177, %v320
      %v322 = vand.u32 %v321, 4294901760
      %v323 = vsub.f32 %v321, %v322
      %v324 = vand.u32 %v323, 4294901760
      %325 = vmatpush1.msra.mxu0 %v324
      %326 = vmatprep.subr.mxu0 0.0
      %v327 = vand.u32 %v178, 4294901760
      %v328 = vsub.f32 %v178, %v327
      %v329 = vand.u32 %v328, 4294901760
      %v330 = vsub.f32 %v328, %v329
      %v331 = vand.u32 %v330, 4294901760
      %332 = vmatpush1.msra.mxu0 %v331
      %333 = vmatprep.subr.mxu0 0.0
      %334 = vmatpush1.msra.mxu0 0.0
      %335 = vmatprep.subr.mxu0 0.0
      %336 = vmatpush1.msra.mxu0 0.0
      %337 = vmatprep.subr.mxu0 0.0
      %338 = vmatpush1.msra.mxu0 0.0
      %339 = vmatprep.subr.mxu0 0.0
      %340 = vmatpush1.msra.mxu0 0.0
      %341 = vmatprep.subr.mxu0 0.0
      %342 = vmatpush1.msra.mxu0 0.0
      %343 = vmatprep.subr.mxu0 0.0
      %344 = vmatpush1.msra.mxu0 0.0
      %345 = vmatprep.subr.mxu0 0.0
      %346 = vmatpush1.msra.mxu0 0.0
      %347 = vmatprep.subr.mxu0 0.0
      %348 = vmatpush1.msra.mxu0 0.0
      %349 = vmatprep.subr.mxu0 0.0
      %350 = vmatpush1.msra.mxu0 0.0
      %351 = vmatprep.subr.mxu0 0.0
      %352 = vmatpush1.msra.mxu0 0.0
      %353 = vmatprep.subr.mxu0 0.0
      %354 = vmatpush1.msra.mxu0 0.0
      %355 = vmatprep.subr.mxu0 0.0
      %356 = vmatpush1.msra.mxu0 0.0
      %357 = vmatprep.subr.mxu0 0.0
      %358 = vmatpush1.msra.mxu0 0.0
      %359 = vmatprep.subr.mxu0 0.0
      %360 = vmatpush1.msra.mxu0 0.0
      %361 = vmatprep.subr.mxu0 0.0
      %362 = vmatpush1.msra.mxu0 0.0
      %363 = vmatprep.subr.mxu0 0.0
      %364 = vmatpush1.msra.mxu0 0.0
      %365 = vmatprep.subr.mxu0 0.0
      %366 = vmatpush1.msra.mxu0 0.0
      %367 = vmatprep.subr.mxu0 0.0
      %368 = vmatpush1.msra.mxu0 0.0
      %369 = vmatprep.subr.mxu0 0.0
      %370 = vmatpush1.msra.mxu0 0.0
      %371 = vmatprep.subr.mxu0 0.0
      %372 = vmatpush1.msra.mxu0 0.0
      %373 = vmatprep.subr.mxu0 0.0
      %374 = vmatpush1.msra.mxu0 0.0
      %375 = vmatprep.subr.mxu0 0.0
      %376 = vmatpush1.msra.mxu0 0.0
      %377 = vmatprep.subr.mxu0 0.0
      %378 = vmatpush1.msra.mxu0 0.0
      %379 = vmatprep.subr.mxu0 0.0
      %380 = vmatpush1.msra.mxu0 0.0
      %381 = vmatprep.subr.mxu0 0.0
      %382 = vmatpush1.msra.mxu0 0.0
      %383 = vmatprep.subr.mxu0 0.0
      %384 = vmatpush1.msra.mxu0 0.0
      %385 = vmatprep.subr.mxu0 0.0
      %386 = vmatpush1.msra.mxu0 0.0
      %387 = vmatprep.subr.mxu0 0.0
      %388 = vmatpush1.msra.mxu0 0.0
      %389 = vmatprep.mubr.f32.mxu0 0.0
      %v390 = vand.u32 %v185, 4294901760
      %391 = vmatmul.mubr.f32.gmra.mrb[0].mxu0 %v390
      %v392 = vpop.f32.mrb[0].mxu0
      %v393 = vadd.f32 %v272, %v392
      %v394 = vpop.f32.mrb[0].mxu0
      %395 = vmatprep.mubr.f32.mxu0 0.0
      %v396 = vand.u32 %v188, 4294901760
      %397 = vmatmul.mubr.f32.gmra.mrb[0].mxu0 %v396
      %v398 = vpop.f32.mrb[0].mxu0
      %v399 = vadd.f32 %v282, %v398
      %v400 = vpop.f32.mrb[0].mxu0
      %401 = vmatprep.mubr.f32.mxu0 0.0
      %v402 = vand.u32 %v191, 4294901760
      %403 = vmatmul.mubr.f32.gmra.mrb[0].mxu0 %v402
      %v404 = vpop.f32.mrb[0].mxu0
      %v405 = vadd.f32 %v292, %v404
      %v406 = vpop.f32.mrb[0].mxu0
      %407 = vmatprep.mubr.f32.mxu0 0.0
      %v408 = vand.u32 %v194, 4294901760
      %409 = vmatmul.mubr.f32.gmra.mrb[0].mxu0 %v408
      %v410 = vpop.f32.mrb[0].mxu0
      %v411 = vadd.f32 %v302, %v410
      %v412 = vpop.f32.mrb[0].mxu0
      %413 = vdwg.mxu0
      %414 = vmatprep.subr.mxu0 0.0
      %v415 = vand.u32 %v175, 4294901760
      %v416 = vsub.f32 %v175, %v415
      %417 = vmatpush1.msra.mxu0 %v416
      %418 = vmatprep.subr.mxu0 0.0
      %v419 = vand.u32 %v176, 4294901760
      %v420 = vsub.f32 %v176, %v419
      %421 = vmatpush1.msra.mxu0 %v420
      %422 = vmatprep.subr.mxu0 0.0
      %v423 = vand.u32 %v177, 4294901760
      %v424 = vsub.f32 %v177, %v423
      %425 = vmatpush1.msra.mxu0 %v424
      %426 = vmatprep.subr.mxu0 0.0
      %v427 = vand.u32 %v178, 4294901760
      %v428 = vsub.f32 %v178, %v427
      %429 = vmatpush1.msra.mxu0 %v428
      %430 = vmatprep.subr.mxu0 0.0
      %431 = vmatpush1.msra.mxu0 0.0
      %432 = vmatprep.subr.mxu0 0.0
      %433 = vmatpush1.msra.mxu0 0.0
      %434 = vmatprep.subr.mxu0 0.0
      %435 = vmatpush1.msra.mxu0 0.0
      %436 = vmatprep.subr.mxu0 0.0
      %437 = vmatpush1.msra.mxu0 0.0
      %438 = vmatprep.subr.mxu0 0.0
      %439 = vmatpush1.msra.mxu0 0.0
      %440 = vmatprep.subr.mxu0 0.0
      %441 = vmatpush1.msra.mxu0 0.0
      %442 = vmatprep.subr.mxu0 0.0
      %443 = vmatpush1.msra.mxu0 0.0
      %444 = vmatprep.subr.mxu0 0.0
      %445 = vmatpush1.msra.mxu0 0.0
      %446 = vmatprep.subr.mxu0 0.0
      %447 = vmatpush1.msra.mxu0 0.0
      %448 = vmatprep.subr.mxu0 0.0
      %449 = vmatpush1.msra.mxu0 0.0
      %450 = vmatprep.subr.mxu0 0.0
      %451 = vmatpush1.msra.mxu0 0.0
      %452 = vmatprep.subr.mxu0 0.0
      %453 = vmatpush1.msra.mxu0 0.0
      %454 = vmatprep.subr.mxu0 0.0
      %455 = vmatpush1.msra.mxu0 0.0
      %456 = vmatprep.subr.mxu0 0.0
      %457 = vmatpush1.msra.mxu0 0.0
      %458 = vmatprep.subr.mxu0 0.0
      %459 = vmatpush1.msra.mxu0 0.0
      %460 = vmatprep.subr.mxu0 0.0
      %461 = vmatpush1.msra.mxu0 0.0
      %462 = vmatprep.subr.mxu0 0.0
      %463 = vmatpush1.msra.mxu0 0.0
      %464 = vmatprep.subr.mxu0 0.0
      %465 = vmatpush1.msra.mxu0 0.0
      %466 = vmatprep.subr.mxu0 0.0
      %467 = vmatpush1.msra.mxu0 0.0
      %468 = vmatprep.subr.mxu0 0.0
      %469 = vmatpush1.msra.mxu0 0.0
      %470 = vmatprep.subr.mxu0 0.0
      %471 = vmatpush1.msra.mxu0 0.0
      %472 = vmatprep.subr.mxu0 0.0
      %473 = vmatpush1.msra.mxu0 0.0
      %474 = vmatprep.subr.mxu0 0.0
      %475 = vmatpush1.msra.mxu0 0.0
      %476 = vmatprep.subr.mxu0 0.0
      %477 = vmatpush1.msra.mxu0 0.0
      %478 = vmatprep.subr.mxu0 0.0
      %479 = vmatpush1.msra.mxu0 0.0
      %480 = vmatprep.subr.mxu0 0.0
      %481 = vmatpush1.msra.mxu0 0.0
      %482 = vmatprep.subr.mxu0 0.0
      %483 = vmatpush1.msra.mxu0 0.0
      %484 = vmatprep.subr.mxu0 0.0
      %485 = vmatpush1.msra.mxu0 0.0
      %486 = vmatprep.mubr.f32.mxu0 0.0
      %v487 = vand.u32 %v185, 4294901760
      %v488 = vsub.f32 %v185, %v487
      %489 = vmatmul.mubr.f32.gmra.mrb[0].mxu0 %v488
      %v490 = vpop.f32.mrb[0].mxu0
      %v491 = vadd.f32 %v393, %v490
      %v492 = vpop.f32.mrb[0].mxu0
      %493 = vmatprep.mubr.f32.mxu0 0.0
      %v494 = vand.u32 %v188, 4294901760
      %v495 = vsub.f32 %v188, %v494
      %496 = vmatmul.mubr.f32.gmra.mrb[0].mxu0 %v495
      %v497 = vpop.f32.mrb[0].mxu0
      %v498 = vadd.f32 %v399, %v497
      %v499 = vpop.f32.mrb[0].mxu0
      %500 = vmatprep.mubr.f32.mxu0 0.0
      %v501 = vand.u32 %v191, 4294901760
      %v502 = vsub.f32 %v191, %v501
      %503 = vmatmul.mubr.f32.gmra.mrb[0].mxu0 %v502
      %v504 = vpop.f32.mrb[0].mxu0
      %v505 = vadd.f32 %v405, %v504
      %v506 = vpop.f32.mrb[0].mxu0
      %507 = vmatprep.mubr.f32.mxu0 0.0
      %v508 = vand.u32 %v194, 4294901760
      %v509 = vsub.f32 %v194, %v508
      %510 = vmatmul.mubr.f32.gmra.mrb[0].mxu0 %v509
      %v511 = vpop.f32.mrb[0].mxu0
      %v512 = vadd.f32 %v411, %v511
      %v513 = vpop.f32.mrb[0].mxu0
      %514 = vdwg.mxu0
      %515 = vmatprep.subr.mxu0 0.0
      %v516 = vand.u32 %v175, 4294901760
      %517 = vmatpush1.msra.mxu0 %v516
      %518 = vmatprep.subr.mxu0 0.0
      %v519 = vand.u32 %v176, 4294901760
      %520 = vmatpush1.msra.mxu0 %v519
      %521 = vmatprep.subr.mxu0 0.0
      %v522 = vand.u32 %v177, 4294901760
      %523 = vmatpush1.msra.mxu0 %v522
      %524 = vmatprep.subr.mxu0 0.0
      %v525 = vand.u32 %v178, 4294901760
      %526 = vmatpush1.msra.mxu0 %v525
      %527 = vmatprep.subr.mxu0 0.0
      %528 = vmatpush1.msra.mxu0 0.0
      %529 = vmatprep.subr.mxu0 0.0
      %530 = vmatpush1.msra.mxu0 0.0
      %531 = vmatprep.subr.mxu0 0.0
      %532 = vmatpush1.msra.mxu0 0.0
      %533 = vmatprep.subr.mxu0 0.0
      %534 = vmatpush1.msra.mxu0 0.0
      %535 = vmatprep.subr.mxu0 0.0
      %536 = vmatpush1.msra.mxu0 0.0
      %537 = vmatprep.subr.mxu0 0.0
      %538 = vmatpush1.msra.mxu0 0.0
      %539 = vmatprep.subr.mxu0 0.0
      %540 = vmatpush1.msra.mxu0 0.0
      %541 = vmatprep.subr.mxu0 0.0
      %542 = vmatpush1.msra.mxu0 0.0
      %543 = vmatprep.subr.mxu0 0.0
      %544 = vmatpush1.msra.mxu0 0.0
      %545 = vmatprep.subr.mxu0 0.0
      %546 = vmatpush1.msra.mxu0 0.0
      %547 = vmatprep.subr.mxu0 0.0
      %548 = vmatpush1.msra.mxu0 0.0
      %549 = vmatprep.subr.mxu0 0.0
      %550 = vmatpush1.msra.mxu0 0.0
      %551 = vmatprep.subr.mxu0 0.0
      %552 = vmatpush1.msra.mxu0 0.0
      %553 = vmatprep.subr.mxu0 0.0
      %554 = vmatpush1.msra.mxu0 0.0
      %555 = vmatprep.subr.mxu0 0.0
      %556 = vmatpush1.msra.mxu0 0.0
      %557 = vmatprep.subr.mxu0 0.0
      %558 = vmatpush1.msra.mxu0 0.0
      %559 = vmatprep.subr.mxu0 0.0
      %560 = vmatpush1.msra.mxu0 0.0
      %561 = vmatprep.subr.mxu0 0.0
      %562 = vmatpush1.msra.mxu0 0.0
      %563 = vmatprep.subr.mxu0 0.0
      %564 = vmatpush1.msra.mxu0 0.0
      %565 = vmatprep.subr.mxu0 0.0
      %566 = vmatpush1.msra.mxu0 0.0
      %567 = vmatprep.subr.mxu0 0.0
      %568 = vmatpush1.msra.mxu0 0.0
      %569 = vmatprep.subr.mxu0 0.0
      %570 = vmatpush1.msra.mxu0 0.0
      %571 = vmatprep.subr.mxu0 0.0
      %572 = vmatpush1.msra.mxu0 0.0
      %573 = vmatprep.subr.mxu0 0.0
      %574 = vmatpush1.msra.mxu0 0.0
      %575 = vmatprep.subr.mxu0 0.0
      %576 = vmatpush1.msra.mxu0 0.0
      %577 = vmatprep.subr.mxu0 0.0
      %578 = vmatpush1.msra.mxu0 0.0
      %579 = vmatprep.subr.mxu0 0.0
      %580 = vmatpush1.msra.mxu0 0.0
      %581 = vmatprep.subr.mxu0 0.0
      %582 = vmatpush1.msra.mxu0 0.0
      %583 = vmatprep.mubr.f32.mxu0 0.0
      %v584 = vand.u32 %v185, 4294901760
      %v585 = vsub.f32 %v185, %v584
      %v586 = vand.u32 %v585, 4294901760
      %587 = vmatmul.mubr.f32.gmra.mrb[0].mxu0 %v586
      %v588 = vpop.f32.mrb[0].mxu0
      %v589 = vadd.f32 %v491, %v588
      %v590 = vpop.f32.mrb[0].mxu0
      %591 = vmatprep.mubr.f32.mxu0 0.0
      %v592 = vand.u32 %v188, 4294901760
      %v593 = vsub.f32 %v188, %v592
      %v594 = vand.u32 %v593, 4294901760
      %595 = vmatmul.mubr.f32.gmra.mrb[0].mxu0 %v594
      %v596 = vpop.f32.mrb[0].mxu0
      %v597 = vadd.f32 %v498, %v596
      %v598 = vpop.f32.mrb[0].mxu0
      %599 = vmatprep.mubr.f32.mxu0 0.0
      %v600 = vand.u32 %v191, 4294901760
      %v601 = vsub.f32 %v191, %v600
      %v602 = vand.u32 %v601, 4294901760
      %603 = vmatmul.mubr.f32.gmra.mrb[0].mxu0 %v602
      %v604 = vpop.f32.mrb[0].mxu0
      %v605 = vadd.f32 %v505, %v604
      %v606 = vpop.f32.mrb[0].mxu0
      %607 = vmatprep.mubr.f32.mxu0 0.0
      %v608 = vand.u32 %v194, 4294901760
      %v609 = vsub.f32 %v194, %v608
      %v610 = vand.u32 %v609, 4294901760
      %611 = vmatmul.mubr.f32.gmra.mrb[0].mxu0 %v610
      %v612 = vpop.f32.mrb[0].mxu0
      %v613 = vadd.f32 %v512, %v612
      %v614 = vpop.f32.mrb[0].mxu0
      %615 = vdwg.mxu0
      %616 = vmatprep.subr.mxu0 0.0
      %v617 = vand.u32 %v175, 4294901760
      %v618 = vsub.f32 %v175, %v617
      %v619 = vand.u32 %v618, 4294901760
      %620 = vmatpush1.msra.mxu0 %v619
      %621 = vmatprep.subr.mxu0 0.0
      %v622 = vand.u32 %v176, 4294901760
      %v623 = vsub.f32 %v176, %v622
      %v624 = vand.u32 %v623, 4294901760
      %625 = vmatpush1.msra.mxu0 %v624
      %626 = vmatprep.subr.mxu0 0.0
      %v627 = vand.u32 %v177, 4294901760
      %v628 = vsub.f32 %v177, %v627
      %v629 = vand.u32 %v628, 4294901760
      %630 = vmatpush1.msra.mxu0 %v629
      %631 = vmatprep.subr.mxu0 0.0
      %v632 = vand.u32 %v178, 4294901760
      %v633 = vsub.f32 %v178, %v632
      %v634 = vand.u32 %v633, 4294901760
      %635 = vmatpush1.msra.mxu0 %v634
      %636 = vmatprep.subr.mxu0 0.0
      %637 = vmatpush1.msra.mxu0 0.0
      %638 = vmatprep.subr.mxu0 0.0
      %639 = vmatpush1.msra.mxu0 0.0
      %640 = vmatprep.subr.mxu0 0.0
      %641 = vmatpush1.msra.mxu0 0.0
      %642 = vmatprep.subr.mxu0 0.0
      %643 = vmatpush1.msra.mxu0 0.0
      %644 = vmatprep.subr.mxu0 0.0
      %645 = vmatpush1.msra.mxu0 0.0
      %646 = vmatprep.subr.mxu0 0.0
      %647 = vmatpush1.msra.mxu0 0.0
      %648 = vmatprep.subr.mxu0 0.0
      %649 = vmatpush1.msra.mxu0 0.0
      %650 = vmatprep.subr.mxu0 0.0
      %651 = vmatpush1.msra.mxu0 0.0
      %652 = vmatprep.subr.mxu0 0.0
      %653 = vmatpush1.msra.mxu0 0.0
      %654 = vmatprep.subr.mxu0 0.0
      %655 = vmatpush1.msra.mxu0 0.0
      %656 = vmatprep.subr.mxu0 0.0
      %657 = vmatpush1.msra.mxu0 0.0
      %658 = vmatprep.subr.mxu0 0.0
      %659 = vmatpush1.msra.mxu0 0.0
      %660 = vmatprep.subr.mxu0 0.0
      %661 = vmatpush1.msra.mxu0 0.0
      %662 = vmatprep.subr.mxu0 0.0
      %663 = vmatpush1.msra.mxu0 0.0
      %664 = vmatprep.subr.mxu0 0.0
      %665 = vmatpush1.msra.mxu0 0.0
      %666 = vmatprep.subr.mxu0 0.0
      %667 = vmatpush1.msra.mxu0 0.0
      %668 = vmatprep.subr.mxu0 0.0
      %669 = vmatpush1.msra.mxu0 0.0
      %670 = vmatprep.subr.mxu0 0.0
      %671 = vmatpush1.msra.mxu0 0.0
      %672 = vmatprep.subr.mxu0 0.0
      %673 = vmatpush1.msra.mxu0 0.0
      %674 = vmatprep.subr.mxu0 0.0
      %675 = vmatpush1.msra.mxu0 0.0
      %676 = vmatprep.subr.mxu0 0.0
      %677 = vmatpush1.msra.mxu0 0.0
      %678 = vmatprep.subr.mxu0 0.0
      %679 = vmatpush1.msra.mxu0 0.0
      %680 = vmatprep.subr.mxu0 0.0
      %681 = vmatpush1.msra.mxu0 0.0
      %682 = vmatprep.subr.mxu0 0.0
      %683 = vmatpush1.msra.mxu0 0.0
      %684 = vmatprep.subr.mxu0 0.0
      %685 = vmatpush1.msra.mxu0 0.0
      %686 = vmatprep.subr.mxu0 0.0
      %687 = vmatpush1.msra.mxu0 0.0
      %688 = vmatprep.subr.mxu0 0.0
      %689 = vmatpush1.msra.mxu0 0.0
      %690 = vmatprep.subr.mxu0 0.0
      %691 = vmatpush1.msra.mxu0 0.0
      %692 = vmatprep.mubr.f32.mxu0 0.0
      %v693 = vand.u32 %v185, 4294901760
      %694 = vmatmul.mubr.f32.gmra.mrb[0].mxu0 %v693
      %v695 = vpop.f32.mrb[0].mxu0
      %v696 = vadd.f32 %v589, %v695
      %v697 = vpop.f32.mrb[0].mxu0
      %698 = vmatprep.mubr.f32.mxu0 0.0
      %v699 = vand.u32 %v188, 4294901760
      %700 = vmatmul.mubr.f32.gmra.mrb[0].mxu0 %v699
      %v701 = vpop.f32.mrb[0].mxu0
      %v702 = vadd.f32 %v597, %v701
      %v703 = vpop.f32.mrb[0].mxu0
      %704 = vmatprep.mubr.f32.mxu0 0.0
      %v705 = vand.u32 %v191, 4294901760
      %706 = vmatmul.mubr.f32.gmra.mrb[0].mxu0 %v705
      %v707 = vpop.f32.mrb[0].mxu0
      %v708 = vadd.f32 %v605, %v707
      %v709 = vpop.f32.mrb[0].mxu0
      %710 = vmatprep.mubr.f32.mxu0 0.0
      %v711 = vand.u32 %v194, 4294901760
      %712 = vmatmul.mubr.f32.gmra.mrb[0].mxu0 %v711
      %v713 = vpop.f32.mrb[0].mxu0
      %v714 = vadd.f32 %v613, %v713
      %v715 = vpop.f32.mrb[0].mxu0
      %716 = vdwg.mxu0
      %717 = vmatprep.subr.mxu0 0.0
      %v718 = vand.u32 %v175, 4294901760
      %719 = vmatpush1.msra.mxu0 %v718
      %720 = vmatprep.subr.mxu0 0.0
      %v721 = vand.u32 %v176, 4294901760
      %722 = vmatpush1.msra.mxu0 %v721
      %723 = vmatprep.subr.mxu0 0.0
      %v724 = vand.u32 %v177, 4294901760
      %725 = vmatpush1.msra.mxu0 %v724
      %726 = vmatprep.subr.mxu0 0.0
      %v727 = vand.u32 %v178, 4294901760
      %728 = vmatpush1.msra.mxu0 %v727
      %729 = vmatprep.subr.mxu0 0.0
      %730 = vmatpush1.msra.mxu0 0.0
      %731 = vmatprep.subr.mxu0 0.0
      %732 = vmatpush1.msra.mxu0 0.0
      %733 = vmatprep.subr.mxu0 0.0
      %734 = vmatpush1.msra.mxu0 0.0
      %735 = vmatprep.subr.mxu0 0.0
      %736 = vmatpush1.msra.mxu0 0.0
      %737 = vmatprep.subr.mxu0 0.0
      %738 = vmatpush1.msra.mxu0 0.0
      %739 = vmatprep.subr.mxu0 0.0
      %740 = vmatpush1.msra.mxu0 0.0
      %741 = vmatprep.subr.mxu0 0.0
      %742 = vmatpush1.msra.mxu0 0.0
      %743 = vmatprep.subr.mxu0 0.0
      %744 = vmatpush1.msra.mxu0 0.0
      %745 = vmatprep.subr.mxu0 0.0
      %746 = vmatpush1.msra.mxu0 0.0
      %747 = vmatprep.subr.mxu0 0.0
      %748 = vmatpush1.msra.mxu0 0.0
      %749 = vmatprep.subr.mxu0 0.0
      %750 = vmatpush1.msra.mxu0 0.0
      %751 = vmatprep.subr.mxu0 0.0
      %752 = vmatpush1.msra.mxu0 0.0
      %753 = vmatprep.subr.mxu0 0.0
      %754 = vmatpush1.msra.mxu0 0.0
      %755 = vmatprep.subr.mxu0 0.0
      %756 = vmatpush1.msra.mxu0 0.0
      %757 = vmatprep.subr.mxu0 0.0
      %758 = vmatpush1.msra.mxu0 0.0
      %759 = vmatprep.subr.mxu0 0.0
      %760 = vmatpush1.msra.mxu0 0.0
      %761 = vmatprep.subr.mxu0 0.0
      %762 = vmatpush1.msra.mxu0 0.0
      %763 = vmatprep.subr.mxu0 0.0
      %764 = vmatpush1.msra.mxu0 0.0
      %765 = vmatprep.subr.mxu0 0.0
      %766 = vmatpush1.msra.mxu0 0.0
      %767 = vmatprep.subr.mxu0 0.0
      %768 = vmatpush1.msra.mxu0 0.0
      %769 = vmatprep.subr.mxu0 0.0
      %770 = vmatpush1.msra.mxu0 0.0
      %771 = vmatprep.subr.mxu0 0.0
      %772 = vmatpush1.msra.mxu0 0.0
      %773 = vmatprep.subr.mxu0 0.0
      %774 = vmatpush1.msra.mxu0 0.0
      %775 = vmatprep.subr.mxu0 0.0
      %776 = vmatpush1.msra.mxu0 0.0
      %777 = vmatprep.subr.mxu0 0.0
      %778 = vmatpush1.msra.mxu0 0.0
      %779 = vmatprep.subr.mxu0 0.0
      %780 = vmatpush1.msra.mxu0 0.0
      %781 = vmatprep.subr.mxu0 0.0
      %782 = vmatpush1.msra.mxu0 0.0
      %783 = vmatprep.subr.mxu0 0.0
      %784 = vmatpush1.msra.mxu0 0.0
      %785 = vmatprep.mubr.f32.mxu0 0.0
      %v786 = vand.u32 %v185, 4294901760
      %787 = vmatmul.mubr.f32.gmra.mrb[0].mxu0 %v786
      %v788 = vpop.f32.mrb[0].mxu0
      %v789 = vadd.f32 %v696, %v788
      %v790 = vpop.f32.mrb[0].mxu0
      %791 = vmatprep.mubr.f32.mxu0 0.0
      %v792 = vand.u32 %v188, 4294901760
      %793 = vmatmul.mubr.f32.gmra.mrb[0].mxu0 %v792
      %v794 = vpop.f32.mrb[0].mxu0
      %v795 = vadd.f32 %v702, %v794
      %v796 = vpop.f32.mrb[0].mxu0
      %797 = vmatprep.mubr.f32.mxu0 0.0
      %v798 = vand.u32 %v191, 4294901760
      %799 = vmatmul.mubr.f32.gmra.mrb[0].mxu0 %v798
      %v800 = vpop.f32.mrb[0].mxu0
      %v801 = vadd.f32 %v708, %v800
      %v802 = vpop.f32.mrb[0].mxu0
      %803 = vmatprep.mubr.f32.mxu0 0.0
      %v804 = vand.u32 %v194, 4294901760
      %805 = vmatmul.mubr.f32.gmra.mrb[0].mxu0 %v804
      %v806 = vpop.f32.mrb[0].mxu0
      %v807 = vadd.f32 %v714, %v806
      %v808 = vpop.f32.mrb[0].mxu0
      %809 = vdwg.mxu0
      %v810 = vmul.f32 %v789, 0.04
      %v811 = vmul.f32 %v795, 0.04
      %v812 = vmul.f32 %v801, 0.04
      %v813 = vmul.f32 %v807, 0.04
      %vm814 = vcmask 64512
      %815 = vst.msk [vmem:[%s174] sm:$0xff] %vm814, %v810
      %816 = vst.msk [vmem:[%s174 + $0x8] sm:$0xff] %vm814, %v811
      %817 = vst.msk [vmem:[%s174 + $0x10] sm:$0xff] %vm814, %v812
      %818 = vst.msk [vmem:[%s174 + $0x18] sm:$0xff] %vm814, %v813
      %p819 = scmp.lt.s32.totalorder %s17, 1
      %s820 = scalar_select %p819, %s17, 1
      %p821 = scmp.lt.s32.totalorder %s18, 0
      %s822 = scalar_select %p821, %s18, 0
      %s823 = smul.addr %s820, 4
      %s824 = sadd.s32 %s822, %s823
      %s825 = smul.addr %s824, 8
      %s826 = scalar_lea.vmem %s2, %s825
      // Predicated region
      $region29: #{moving_avg_pallas.1} parent=27 // pred_check
        %p827 = pneg %p94
      $region30: #{moving_avg_pallas.1} parent=27 // pred_check_branch
        %829 = sbr.rel (%p827) target = $region32
      $region31: #{moving_avg_pallas.1} parent=27 // pred_region
        _
      $region32: #{moving_avg_pallas.1} parent=27 // pred_fallthru
        _
    $region28: #{moving_avg_pallas.1} parent=5 // pred_fallthru
      _
    %p830 = scmp.le.s32.totalorder 2, %s8
    // Predicated region
    $region33: #{moving_avg_pallas.1} parent=5 // pred_check
      %p831 = pneg %p830
    $region34: #{moving_avg_pallas.1} parent=5 // pred_check_branch
      %833 = sbr.rel (%p831) target = $region36
    $region35: #{moving_avg_pallas.1} parent=5 // pred_region
      %s834 = ssub.s32 %s8, 2
      // Predicated region
      $region37: #{moving_avg_pallas.1} parent=35 // pred_check
        %p835 = pneg %p100
      $region38: #{moving_avg_pallas.1} parent=35 // pred_check_branch
        %837 = sbr.rel (%p835) target = $region40
      $region39: #{moving_avg_pallas.1} parent=35 // pred_region
        %p838 = scmp.lt.s32.totalorder %s19, 1
        %s839 = scalar_select %p838, %s19, 1
        %p840 = scmp.lt.s32.totalorder %s20, 0
        %s841 = scalar_select %p840, %s20, 0
        %s842 = smul.addr %s839, 4
        %s843 = sadd.s32 %s841, %s842
        %s844 = smul.addr %s843, 8
        %s845 = scalar_lea.vmem %s2, %s844
      $region40: #{moving_avg_pallas.1} parent=35 // pred_fallthru
        _
    $region36: #{moving_avg_pallas.1} parent=5 // pred_fallthru
      _
  $region6: #{moving_avg_pallas.1} parent=0 // loop_footer
    %s12 = sadd.s32 1, %s8
  $region7: #{moving_avg_pallas.1} parent=0 // loop_footer_branch
    %7 = sbr.rel target = $region3
  $region8: #{moving_avg_pallas.1} parent=0 // loop_exit
    _

</llo_original>
